<compile_context>
chip_gen: v5e
topology: v5e:2x2
jax: 0.10.0
libtpu: 0.0.40
codegen_flags: <defaults>
</compile_context>

<pallas_src>
import functools

import jax
import jax.numpy as jnp
from jax import lax
from jax.experimental import pallas as pl
from jax.experimental.pallas import tpu as pltpu

TILE_N = 2048      # lanes (collocation points) per grid step for large N
SUB_N = 512        # lanes processed per inner iteration (bounds vreg pressure)
_SMALL_N = 2 * TILE_N  # up to this many points -> single fused grid step


def _round_up(a, b):
    return ((a + b - 1) // b) * b


def _choose_tiling(n):
    """Return (tile, n_pad): lanes per grid step and padded point count."""
    if n <= _SMALL_N:
        tile = max(SUB_N, _round_up(n, SUB_N))
        return tile, tile                      # one fused grid step
    # Large N: big tiles, even number of steps so v7x can use both TensorCores.
    return TILE_N, _round_up(n, 2 * TILE_N)


# ----------------------------------------------------------------------------
# Pallas kernel: fused 3-layer MLP, points-on-lanes layout
# ----------------------------------------------------------------------------
def _pinn_mlp_kernel(tx_ref, c1_ref, w2_ref, c3_ref, o_ref, *, sub_n):
    """Fused tanh MLP over one tile of collocation points.

    tx_ref: (2, tile)    rows [t, x]                     (compute dtype)
    c1_ref: (hid, 4)     cols [w1_t, w1_x, b1, b2]       (compute dtype)
    w2_ref: (hid, hid)                                   (compute dtype)
    c3_ref: (2, hid)     rows [w3, (b3, 0, ...)]         (compute dtype)
    o_ref : (1, tile)    u                               (float32)
    """
    cdtype = tx_ref.dtype
    w1t = c1_ref[:, 0:1]                      # (hid, 1)
    w1x = c1_ref[:, 1:2]                      # (hid, 1)
    b1 = c1_ref[:, 2:3]                       # (hid, 1)
    b2 = c1_ref[:, 3:4]                       # (hid, 1)
    w2 = w2_ref[...]                          # (hid, hid)
    w3 = c3_ref[0:1, :]                       # (1, hid)
    b3 = c3_ref[1:2, 0:1].astype(jnp.float32) # (1, 1)

    n_sub = tx_ref.shape[1] // sub_n          # static trip count

    def body(c, carry):
        j = pl.multiple_of(c * sub_n, sub_n)
        t = tx_ref[0:1, pl.ds(j, sub_n)]      # (1, sub_n)
        x = tx_ref[1:2, pl.ds(j, sub_n)]      # (1, sub_n)

        # Layer 1 (2 -> hid) on the VPU: outer-product broadcasts (K=2 matmul
        # would waste the MXU).
        h1 = jnp.tanh(w1t * t + w1x * x + b1)                      # (hid, sub_n)

        # Layer 2 (hid -> hid) on the MXU (f32 internal accumulate); tanh in
        # the compute dtype (bf16 on v6e/v7x, f32 on v5e).
        h2 = jnp.tanh(jnp.dot(w2, h1, preferred_element_type=cdtype) + b2)

        # Layer 3 (hid -> 1) on the otherwise-idle MXU; f32 output row.
        u = jnp.dot(w3, h2, preferred_element_type=jnp.float32) + b3
        o_ref[:, pl.ds(j, sub_n)] = u
        return carry

    lax.fori_loop(0, n_sub, body, 0, unroll=True)


# ----------------------------------------------------------------------------
# Host-side wrapper
# ----------------------------------------------------------------------------
@functools.partial(jax.jit, static_argnames=("compute_dtype",))
def _pinn_forward_impl(t, x, params, compute_dtype):
    c1, w2, c3 = params
    hid = w2.shape[0]
    cd = compute_dtype

    t_flat = t.reshape(-1).astype(jnp.float32)
    x_flat = x.reshape(-1).astype(jnp.float32)
    n = t_flat.shape[0]
    tile, n_pad = _choose_tiling(n)

    # Merge t/x into one (2, n_pad) operand; pad once (tail outputs discarded).
    tx = jnp.stack([t_flat, x_flat], axis=0)
    tx = jnp.pad(tx, ((0, 0), (0, n_pad - n))).astype(cd)

    const = lambda shape: pl.BlockSpec(shape, lambda i: (0, 0))  # resident weights

    out_row = pl.pallas_call(
        functools.partial(_pinn_mlp_kernel, sub_n=SUB_N),
        out_shape=jax.ShapeDtypeStruct((1, n_pad), jnp.float32),
        grid=(n_pad // tile,),
        in_specs=[
            pl.BlockSpec((2, tile), lambda i: (0, i)),   # [t; x] tile
            const((hid, 4)),                             # [w1_t | w1_x | b1 | b2]
            const((hid, hid)),                           # w2
            const((2, hid)),                             # [w3 ; b3-row]
        ],
        out_specs=pl.BlockSpec((1, tile), lambda i: (0, i)),
        compiler_params=pltpu.CompilerParams(
            dimension_semantics=("parallel",),
        ),
    )(tx, c1.astype(cd), w2.astype(cd), c3.astype(cd))

    return out_row[0, :n][:, None]            # (N, 1), matches PyTorch forward


def _default_compute_dtype():
    """bf16 activations on chips with a bf16 VPU/EUP (v6e, v7x); f32 otherwise."""
    try:
        kind = jax.devices()[0].device_kind.lower()
    except Exception:
        return jnp.float32
    if any(tag in kind for tag in ("v6", "v7", "7x")):
        return jnp.bfloat16
    return jnp.float32


def pinn_forward(t, x, params, compute_dtype=None):
    """Equivalent of PINN.forward(t, x): concat [t, x] along features, run the MLP."""
    if compute_dtype is None:
        compute_dtype = _default_compute_dtype()
    return _pinn_forward_impl(t, x, params, compute_dtype)


# ----------------------------------------------------------------------------
# Parameter construction (mimics nn.Linear default init) + plain-JAX reference
# ----------------------------------------------------------------------------
def make_pinn_params(key, num_inputs=2, num_outputs=1, num_hidden=(32, 32)):
    assert num_inputs == 2 and num_outputs == 1, "fused kernel targets the 1D wave PINN"
    dims = [num_inputs, *num_hidden, num_outputs]
    assert len(dims) == 4, "this fused kernel expects exactly 2 hidden layers"
    assert num_hidden[0] == num_hidden[1]

    logical = []
    for i in range(3):
        fan_in, fan_out = dims[i], dims[i + 1]
        key, kw, kb = jax.random.split(key, 3)
        bound = float(fan_in) ** -0.5
        w = jax.random.uniform(kw, (fan_out, fan_in), jnp.float32, -bound, bound)
        b = jax.random.uniform(kb, (fan_out,), jnp.float32, -bound, bound)
        logical.append((w, b))

    (w1, b1), (w2, b2), (w3, b3) = logical
    hid = num_hidden[0]
    # Packed constants (perf review: merge the many tiny (32,1)/(1,1) operands).
    c1 = jnp.stack([w1[:, 0], w1[:, 1], b1, b2], axis=1)                     # (hid, 4)
    b3_row = jnp.zeros((1, hid), jnp.float32).at[0, 0].set(b3[0])
    c3 = jnp.concatenate([w3, b3_row], axis=0)                               # (2, hid)
    return (c1, w2, c3), logical


def _reference_forward(t, x, logical):
    """Plain-JAX reference of the same MLP (for correctness checks)."""
    (w1, b1), (w2, b2), (w3, b3) = logical
    if t.ndim == 1:
        t = t[:, None]
    if x.ndim == 1:
        x = x[:, None]
    inp = jnp.concatenate([t, x], axis=1).astype(jnp.float32)
    h = jnp.tanh(inp @ w1.T + b1)
    h = jnp.tanh(h @ w2.T + b2)
    return h @ w3.T + b3


if __name__ == "__main__":
    key = jax.random.PRNGKey(0)
    kp, kt, kx = jax.random.split(key, 3)

    params, logical = make_pinn_params(kp, num_inputs=2, num_outputs=1, num_hidden=(32, 32))

    # Batch of collocation points (t, x), 1-D like the PyTorch usage.
    # N is deliberately not a multiple of the tile to exercise the padded tail.
    N = 1000
    maxtime, length = 1.0, 1.0
    t = jax.random.uniform(kt, (N,), jnp.float32) * maxtime
    x = jax.random.uniform(kx, (N,), jnp.float32) * length

    u_ref = _reference_forward(t, x, logical)

    # 1) f32 compute path: exact check of the kernel math (valid on every generation).
    u_f32 = jax.block_until_ready(pinn_forward(t, x, params, compute_dtype=jnp.float32))
    assert u_f32.shape == (N, 1)
    assert jnp.allclose(u_f32, u_ref, atol=1e-5, rtol=1e-5)

    # 2) Device-default path: bf16 activations/tanh on v6e/v7x, f32 elsewhere.
    #    The bf16 check uses a smoke tolerance; PDE losses that need second-order
    #    input gradients should stay on the f32 path.
    cd = _default_compute_dtype()
    u = jax.block_until_ready(pinn_forward(t, x, params))
    tol = 1e-5 if cd == jnp.float32 else 1e-1
    assert u.shape == (N, 1)
    assert jnp.allclose(u, u_ref, atol=tol, rtol=tol)

    # TODO(synk): pde_loss / ic_loss / bc_loss need input gradients (torch.autograd.grad);
    # differentiating through pl.pallas_call requires a custom_vjp / hand-written backward
    # kernel, so the training-loss path is not implemented here.
    print("KERNEL_OK")
</pallas_src>

<mosaic_0001>
module attributes {stable_mosaic.version = 11 : i64} {
  func.func @_pinn_mlp_kernel(%arg0: i32, %arg1: memref<2x1024xf32, #tpu.memory_space<vmem>>, %arg2: memref<32x4xf32, #tpu.memory_space<vmem>>, %arg3: memref<32x32xf32, #tpu.memory_space<vmem>>, %arg4: memref<2x32xf32, #tpu.memory_space<vmem>>, %arg5: memref<1x1024xf32, #tpu.memory_space<vmem>>) attributes {dimension_semantics = [#tpu.dimension_semantics<parallel>], iteration_bounds = array<i64: 1>, scalar_prefetch = 0 : i64, scratch_operands = 0 : i64, tpu.core_type = #tpu.core_type<tc>, window_params = [{transform_indices = @transform_0, window_bounds = array<i64: 2, 1024>}, {pipeline_mode = #tpu.pipeline_mode<synchronous>, transform_indices = @transform_1, window_bounds = array<i64: 32, 4>}, {pipeline_mode = #tpu.pipeline_mode<synchronous>, transform_indices = @transform_2, window_bounds = array<i64: 32, 32>}, {pipeline_mode = #tpu.pipeline_mode<synchronous>, transform_indices = @transform_3, window_bounds = array<i64: 2, 32>}, {transform_indices = @transform_4, window_bounds = array<i64: 1, 1024>}]} {
    %c0 = arith.constant 0 : index
    %c0_0 = arith.constant 0 : index
    %0 = vector.load %arg2[%c0, %c0_0] : memref<32x4xf32, #tpu.memory_space<vmem>>, vector<32x1xf32>
    %c0_1 = arith.constant 0 : index
    %c1 = arith.constant 1 : index
    %1 = vector.load %arg2[%c0_1, %c1] : memref<32x4xf32, #tpu.memory_space<vmem>>, vector<32x1xf32>
    %c0_2 = arith.constant 0 : index
    %c2 = arith.constant 2 : index
    %2 = vector.load %arg2[%c0_2, %c2] : memref<32x4xf32, #tpu.memory_space<vmem>>, vector<32x1xf32>
    %c0_3 = arith.constant 0 : index
    %c3 = arith.constant 3 : index
    %3 = vector.load %arg2[%c0_3, %c3] : memref<32x4xf32, #tpu.memory_space<vmem>>, vector<32x1xf32>
    %c0_4 = arith.constant 0 : index
    %c0_5 = arith.constant 0 : index
    %4 = vector.load %arg3[%c0_4, %c0_5] : memref<32x32xf32, #tpu.memory_space<vmem>>, vector<32x32xf32>
    %c0_6 = arith.constant 0 : index
    %c0_7 = arith.constant 0 : index
    %5 = vector.load %arg4[%c0_6, %c0_7] : memref<2x32xf32, #tpu.memory_space<vmem>>, vector<1x32xf32>
    %c1_8 = arith.constant 1 : index
    %c0_9 = arith.constant 0 : index
    %6 = vector.load %arg4[%c1_8, %c0_9] : memref<2x32xf32, #tpu.memory_space<vmem>>, vector<1x1xf32>
    %c0_i32 = arith.constant 0 : i32
    %c512_i32 = arith.constant 512 : i32
    %7 = arith.muli %c0_i32, %c512_i32 : i32
    %8 = tpu.assume_multiple %7, 512 : i32
    %c0_10 = arith.constant 0 : index
    %9 = arith.index_cast %8 : i32 to index
    %10 = vector.load %arg1[%c0_10, %9] : memref<2x1024xf32, #tpu.memory_space<vmem>>, vector<1x512xf32>
    %c1_11 = arith.constant 1 : index
    %11 = arith.index_cast %8 : i32 to index
    %12 = vector.load %arg1[%c1_11, %11] : memref<2x1024xf32, #tpu.memory_space<vmem>>, vector<1x512xf32>
    %13 = vector.broadcast %0 : vector<32x1xf32> to vector<32x512xf32>
    %14 = vector.broadcast %10 : vector<1x512xf32> to vector<32x512xf32>
    %15 = arith.mulf %13, %14 : vector<32x512xf32>
    %16 = vector.broadcast %1 : vector<32x1xf32> to vector<32x512xf32>
    %17 = vector.broadcast %12 : vector<1x512xf32> to vector<32x512xf32>
    %18 = arith.mulf %16, %17 : vector<32x512xf32>
    %19 = arith.addf %15, %18 : vector<32x512xf32>
    %20 = vector.broadcast %2 : vector<32x1xf32> to vector<32x512xf32>
    %21 = arith.addf %19, %20 : vector<32x512xf32>
    %22 = math.tanh %21 : vector<32x512xf32>
    %cst = arith.constant dense<0.000000e+00> : vector<32x512xf32>
    %23 = tpu.matmul %4, %22, %cst {dimension_numbers = #tpu.dot_dimension_numbers<[1], [0], [0], [1], [0, 0, 1, 1], [], []>} : vector<32x32xf32>, vector<32x512xf32>, vector<32x512xf32> -> vector<32x512xf32>
    %24 = vector.broadcast %3 : vector<32x1xf32> to vector<32x512xf32>
    %25 = arith.addf %23, %24 : vector<32x512xf32>
    %26 = math.tanh %25 : vector<32x512xf32>
    %cst_12 = arith.constant dense<0.000000e+00> : vector<1x512xf32>
    %27 = tpu.matmul %5, %26, %cst_12 {dimension_numbers = #tpu.dot_dimension_numbers<[1], [0], [0], [1], [0, 0, 1, 1], [], []>} : vector<1x32xf32>, vector<32x512xf32>, vector<1x512xf32> -> vector<1x512xf32>
    %28 = vector.broadcast %6 : vector<1x1xf32> to vector<1x512xf32>
    %29 = arith.addf %27, %28 : vector<1x512xf32>
    %c0_13 = arith.constant 0 : index
    %30 = arith.index_cast %8 : i32 to index
    %31 = vector.load %arg5[%c0_13, %30] : memref<1x1024xf32, #tpu.memory_space<vmem>>, vector<1x512xf32>
    tpu.vector_store %arg5[%c0_13, %30], %29 {strides = array<i32>} : memref<1x1024xf32, #tpu.memory_space<vmem>>, vector<1x512xf32>,
    %c1_i32 = arith.constant 1 : i32
    %c512_i32_14 = arith.constant 512 : i32
    %32 = arith.muli %c1_i32, %c512_i32_14 : i32
    %33 = tpu.assume_multiple %32, 512 : i32
    %c0_15 = arith.constant 0 : index
    %34 = arith.index_cast %33 : i32 to index
    %35 = vector.load %arg1[%c0_15, %34] : memref<2x1024xf32, #tpu.memory_space<vmem>>, vector<1x512xf32>
    %c1_16 = arith.constant 1 : index
    %36 = arith.index_cast %33 : i32 to index
    %37 = vector.load %arg1[%c1_16, %36] : memref<2x1024xf32, #tpu.memory_space<vmem>>, vector<1x512xf32>
    %38 = vector.broadcast %0 : vector<32x1xf32> to vector<32x512xf32>
    %39 = vector.broadcast %35 : vector<1x512xf32> to vector<32x512xf32>
    %40 = arith.mulf %38, %39 : vector<32x512xf32>
    %41 = vector.broadcast %1 : vector<32x1xf32> to vector<32x512xf32>
    %42 = vector.broadcast %37 : vector<1x512xf32> to vector<32x512xf32>
    %43 = arith.mulf %41, %42 : vector<32x512xf32>
    %44 = arith.addf %40, %43 : vector<32x512xf32>
    %45 = vector.broadcast %2 : vector<32x1xf32> to vector<32x512xf32>
    %46 = arith.addf %44, %45 : vector<32x512xf32>
    %47 = math.tanh %46 : vector<32x512xf32>
    %cst_17 = arith.constant dense<0.000000e+00> : vector<32x512xf32>
    %48 = tpu.matmul %4, %47, %cst_17 {dimension_numbers = #tpu.dot_dimension_numbers<[1], [0], [0], [1], [0, 0, 1, 1], [], []>} : vector<32x32xf32>, vector<32x512xf32>, vector<32x512xf32> -> vector<32x512xf32>
    %49 = vector.broadcast %3 : vector<32x1xf32> to vector<32x512xf32>
    %50 = arith.addf %48, %49 : vector<32x512xf32>
    %51 = math.tanh %50 : vector<32x512xf32>
    %cst_18 = arith.constant dense<0.000000e+00> : vector<1x512xf32>
    %52 = tpu.matmul %5, %51, %cst_18 {dimension_numbers = #tpu.dot_dimension_numbers<[1], [0], [0], [1], [0, 0, 1, 1], [], []>} : vector<1x32xf32>, vector<32x512xf32>, vector<1x512xf32> -> vector<1x512xf32>
    %53 = vector.broadcast %6 : vector<1x1xf32> to vector<1x512xf32>
    %54 = arith.addf %52, %53 : vector<1x512xf32>
    %c0_19 = arith.constant 0 : index
    %55 = arith.index_cast %33 : i32 to index
    %56 = vector.load %arg5[%c0_19, %55] : memref<1x1024xf32, #tpu.memory_space<vmem>>, vector<1x512xf32>
    tpu.vector_store %arg5[%c0_19, %55], %54 {strides = array<i32>} : memref<1x1024xf32, #tpu.memory_space<vmem>>, vector<1x512xf32>,
    %c2_i32 = arith.constant 2 : i32
    return
  }
  func.func @transform_0(%arg0: i32) -> (i32, i32) {
    %c0_i32 = arith.constant 0 : i32
    %c0_i32_0 = arith.constant 0 : i32
    return %c0_i32, %arg0 : i32, i32
  }
  func.func @transform_1(%arg0: i32) -> (i32, i32) {
    %c0_i32 = arith.constant 0 : i32
    %c0_i32_0 = arith.constant 0 : i32
    %c0_i32_1 = arith.constant 0 : i32
    return %c0_i32, %c0_i32_0 : i32, i32
  }
  func.func @transform_2(%arg0: i32) -> (i32, i32) {
    %c0_i32 = arith.constant 0 : i32
    %c0_i32_0 = arith.constant 0 : i32
    %c0_i32_1 = arith.constant 0 : i32
    return %c0_i32, %c0_i32_0 : i32, i32
  }
  func.func @transform_3(%arg0: i32) -> (i32, i32) {
    %c0_i32 = arith.constant 0 : i32
    %c0_i32_0 = arith.constant 0 : i32
    %c0_i32_1 = arith.constant 0 : i32
    return %c0_i32, %c0_i32_0 : i32, i32
  }
  func.func @transform_4(%arg0: i32) -> (i32, i32) {
    %c0_i32 = arith.constant 0 : i32
    %c0_i32_0 = arith.constant 0 : i32
    return %c0_i32, %arg0 : i32, i32
  }
}

</mosaic_0001>

<llo_original>
// kernel: _pinn_forward_impl.1
$region0: #{_pinn_forward_impl.1}
  #allocation0 [shape = 'u32[]', space=smem, size = 0x4, offset = 0x4, fixed_abs, tag = 'smem constant byte address 0x4 - core index']
  #allocation1 [shape = 'u32[72,128]{1,0:T(1,128)}', space=vmem, size = 0x9000, scoped, tag = 'internal scratch']
  %s0 = inlined_call_operand.vmem [shape: f32[2,1024], index: 0, kind: input, shape index: {}]
  %s1 = inlined_call_operand.vmem [shape: f32[32,4], index: 1, kind: input, shape index: {}]
  %s2 = inlined_call_operand.vmem [shape: f32[32,32], index: 2, kind: input, shape index: {}]
  %s3 = inlined_call_operand.vmem [shape: f32[2,32], index: 3, kind: input, shape index: {}]
  %s4 = inlined_call_operand.vmem [shape: f32[1,1024], index: 4, kind: output, shape index: {}]
  %s5 = sld [smem:[#allocation0]]
  $region26: #{_pinn_forward_impl.1} parent=0
    _
  %s7 = ssub.s32 1, %s5
  %s8 = scalar_select 0, %s7, %s5
  // Predicated region
  $region2: #{_pinn_forward_impl.1} parent=0 // pred_check
    _
  $region3: #{_pinn_forward_impl.1} parent=0 // pred_check_branch
    %10 = sbr.rel (0) target = $region5
  $region4: #{_pinn_forward_impl.1} parent=0 // pred_region
    _
  $region5: #{_pinn_forward_impl.1} parent=0 // pred_fallthru
    _
  // Predicated region
  $region6: #{_pinn_forward_impl.1} parent=0 // pred_check
    _
  $region7: #{_pinn_forward_impl.1} parent=0 // pred_check_branch
    %12 = sbr.rel (0) target = $region9
  $region8: #{_pinn_forward_impl.1} parent=0 // pred_region
    _
  $region9: #{_pinn_forward_impl.1} parent=0 // pred_fallthru
    _
  // Predicated region
  $region10: #{_pinn_forward_impl.1} parent=0 // pred_check
    _
  $region11: #{_pinn_forward_impl.1} parent=0 // pred_check_branch
    %14 = sbr.rel (0) target = $region13
  $region12: #{_pinn_forward_impl.1} parent=0 // pred_region
    _
  $region13: #{_pinn_forward_impl.1} parent=0 // pred_fallthru
    _
  // Predicated region
  $region14: #{_pinn_forward_impl.1} parent=0 // pred_check
    _
  $region15: #{_pinn_forward_impl.1} parent=0 // pred_check_branch
    %16 = sbr.rel (0) target = $region17
  $region16: #{_pinn_forward_impl.1} parent=0 // pred_region
    _
  $region17: #{_pinn_forward_impl.1} parent=0 // pred_fallthru
    _
  %v17 = vld [vmem:[%s1] sm:$0xff]
  %v18 = vld [vmem:[%s1 + $0x8] sm:$0xff]
  %v19 = vld [vmem:[%s1 + $0x10] sm:$0xff]
  %v20 = vld [vmem:[%s1 + $0x18] sm:$0xff]
  %v21 = vld [vmem:[%s2] sm:$0xff]
  %v22 = vld [vmem:[%s2 + $0x8] sm:$0xff]
  %v23 = vld [vmem:[%s2 + $0x10] sm:$0xff]
  %v24 = vld [vmem:[%s2 + $0x18] sm:$0xff]
  %v25 = vld [vmem:[%s3] sm:$0x1]
  %v26 = vld [vmem:[%s3 + $0x1] sm:$0x1]
  %v27 = vld [vmem:[%s0] ss:$2 sm:$0xf]
  %s28 = scalar_lea.vmem %s0, 1
  %v29 = vld [vmem:[%s28] ss:$2 sm:$0xf]
  %31 = vset.pattern.permute.xlu0 0
  %32 = vperm.xlu0 %31, %v17
  %v33 = vpop.permute.xlu0 %32
  %36 = vset.pattern.permute.xlu0 0
  %37 = vperm.xlu0 %36, %v18
  %v38 = vpop.permute.xlu0 %37
  %41 = vset.pattern.permute.xlu0 0
  %42 = vperm.xlu0 %41, %v19
  %v43 = vpop.permute.xlu0 %42
  %46 = vset.pattern.permute.xlu0 0
  %47 = vperm.xlu0 %46, %v20
  %v48 = vpop.permute.xlu0 %47
  %v51 = vperm.slane %v27, 0
  %v52 = vperm.slane %v27, 1
  %v53 = vperm.slane %v27, 2
  %v54 = vperm.slane %v27, 3
  %v59 = vmul.f32 %v33, %v51
  %v60 = vmul.f32 %v33, %v52
  %v61 = vmul.f32 %v33, %v53
  %v62 = vmul.f32 %v33, %v54
  %v63 = vmul.f32 %v38, %v51
  %v64 = vmul.f32 %v38, %v52
  %v65 = vmul.f32 %v38, %v53
  %v66 = vmul.f32 %v38, %v54
  %v67 = vmul.f32 %v43, %v51
  %v68 = vmul.f32 %v43, %v52
  %v69 = vmul.f32 %v43, %v53
  %v70 = vmul.f32 %v43, %v54
  %v71 = vmul.f32 %v48, %v51
  %v72 = vmul.f32 %v48, %v52
  %v73 = vmul.f32 %v48, %v53
  %v74 = vmul.f32 %v48, %v54
  %75 = vset.pattern.permute.xlu0 1
  %76 = vperm.xlu0 %75, %v17
  %v77 = vpop.permute.xlu0 %76
  %79 = vset.pattern.permute.xlu0 1
  %80 = vperm.xlu0 %79, %v18
  %v81 = vpop.permute.xlu0 %80
  %83 = vset.pattern.permute.xlu0 1
  %84 = vperm.xlu0 %83, %v19
  %v85 = vpop.permute.xlu0 %84
  %87 = vset.pattern.permute.xlu0 1
  %88 = vperm.xlu0 %87, %v20
  %v89 = vpop.permute.xlu0 %88
  %v92 = vperm.slane %v29, 0
  %v93 = vperm.slane %v29, 1
  %v94 = vperm.slane %v29, 2
  %v95 = vperm.slane %v29, 3
  %v100 = vmul.f32 %v77, %v92
  %v101 = vmul.f32 %v77, %v93
  %v102 = vmul.f32 %v77, %v94
  %v103 = vmul.f32 %v77, %v95
  %v104 = vmul.f32 %v81, %v92
  %v105 = vmul.f32 %v81, %v93
  %v106 = vmul.f32 %v81, %v94
  %v107 = vmul.f32 %v81, %v95
  %v108 = vmul.f32 %v85, %v92
  %v109 = vmul.f32 %v85, %v93
  %v110 = vmul.f32 %v85, %v94
  %v111 = vmul.f32 %v85, %v95
  %v112 = vmul.f32 %v89, %v92
  %v113 = vmul.f32 %v89, %v93
  %v114 = vmul.f32 %v89, %v94
  %v115 = vmul.f32 %v89, %v95
  %v116 = vadd.f32 %v59, %v100
  %v117 = vadd.f32 %v60, %v101
  %v118 = vadd.f32 %v61, %v102
  %v119 = vadd.f32 %v62, %v103
  %v120 = vadd.f32 %v63, %v104
  %v121 = vadd.f32 %v64, %v105
  %v122 = vadd.f32 %v65, %v106
  %v123 = vadd.f32 %v66, %v107
  %v124 = vadd.f32 %v67, %v108
  %v125 = vadd.f32 %v68, %v109
  %v126 = vadd.f32 %v69, %v110
  %v127 = vadd.f32 %v70, %v111
  %v128 = vadd.f32 %v71, %v112
  %v129 = vadd.f32 %v72, %v113
  %v130 = vadd.f32 %v73, %v114
  %v131 = vadd.f32 %v74, %v115
  %132 = vset.pattern.permute.xlu0 2
  %133 = vperm.xlu0 %132, %v17
  %v134 = vpop.permute.xlu0 %133
  %136 = vset.pattern.permute.xlu0 2
  %137 = vperm.xlu0 %136, %v18
  %v138 = vpop.permute.xlu0 %137
  %140 = vset.pattern.permute.xlu0 2
  %141 = vperm.xlu0 %140, %v19
  %v142 = vpop.permute.xlu0 %141
  %144 = vset.pattern.permute.xlu0 2
  %145 = vperm.xlu0 %144, %v20
  %v146 = vpop.permute.xlu0 %145
  %v148 = vadd.f32 %v116, %v134
  %v149 = vadd.f32 %v117, %v134
  %v150 = vadd.f32 %v118, %v134
  %v151 = vadd.f32 %v119, %v134
  %v152 = vadd.f32 %v120, %v138
  %v153 = vadd.f32 %v121, %v138
  %v154 = vadd.f32 %v122, %v138
  %v155 = vadd.f32 %v123, %v138
  %v156 = vadd.f32 %v124, %v142
  %v157 = vadd.f32 %v125, %v142
  %v158 = vadd.f32 %v126, %v142
  %v159 = vadd.f32 %v127, %v142
  %v160 = vadd.f32 %v128, %v146
  %v161 = vadd.f32 %v129, %v146
  %v162 = vadd.f32 %v130, %v146
  %v163 = vadd.f32 %v131, %v146
  %v164 = vtanh.pop %v148
  %v165 = vtanh.pop %v149
  %v166 = vtanh.pop %v150
  %v167 = vtanh.pop %v151
  %v168 = vtanh.pop %v152
  %v169 = vtanh.pop %v153
  %v170 = vtanh.pop %v154
  %v171 = vtanh.pop %v155
  %v172 = vtanh.pop %v156
  %v173 = vtanh.pop %v157
  %v174 = vtanh.pop %v158
  %v175 = vtanh.pop %v159
  %v176 = vtanh.pop %v160
  %v177 = vtanh.pop %v161
  %v178 = vtanh.pop %v162
  %v179 = vtanh.pop %v163
  %180 = vset.pattern.permute.xlu0 3
  %181 = vperm.xlu0 %180, %v17
  %v182 = vpop.permute.xlu0 %181
  %184 = vset.pattern.permute.xlu0 3
  %185 = vperm.xlu0 %184, %v18
  %v186 = vpop.permute.xlu0 %185
  %188 = vset.pattern.permute.xlu0 3
  %189 = vperm.xlu0 %188, %v19
  %v190 = vpop.permute.xlu0 %189
  %192 = vset.pattern.permute.xlu0 3
  %193 = vperm.xlu0 %192, %v20
  %v194 = vpop.permute.xlu0 %193
  %vm196 = vcmask 261120
  %v198 = vsel %vm196, %v21, 0
  %v201 = vsel %vm196, %v22, 0
  %v204 = vsel %vm196, %v23, 0
  %v207 = vsel %vm196, %v24, 0
  %209 = vmatpush.msra.mxu0 0.0
  %210 = vmatpush.msra.mxu0 0.0
  %211 = vmatpush.msra.mxu0 0.0
  %212 = vmatpush.msra.mxu0 0.0
  %213 = vmatpush.msra.mxu0 0.0
  %214 = vmatpush.msra.mxu0 0.0
  %215 = vmatpush.msra.mxu0 0.0
  %216 = vmatpush.msra.mxu0 0.0
  %217 = vmatpush.msra.mxu0 0.0
  %218 = vmatpush.msra.mxu0 0.0
  %219 = vmatpush.msra.mxu0 0.0
  %220 = vmatpush.msra.mxu0 0.0
  %221 = vmatpush.msra.mxu0 %v176
  %222 = vmatpush.msra.mxu0 %v172
  %223 = vmatpush.msra.mxu0 %v168
  %224 = vmatpush.msra.mxu0 %v164
  %225 = vmatmul.f32.gmra.mxu0 %v198
  %v226 = vpop.f32.mrf.mxu0
  %v227 = vadd.f32 %v182, %v226
  %228 = vmatmul.f32.gmra.mxu0 %v201
  %v229 = vpop.f32.mrf.mxu0
  %v230 = vadd.f32 %v186, %v229
  %231 = vmatmul.f32.gmra.mxu0 %v204
  %v232 = vpop.f32.mrf.mxu0
  %v233 = vadd.f32 %v190, %v232
  %234 = vmatmul.f32.gmra.mxu0 %v207
  %v235 = vpop.f32.mrf.mxu0
  %v236 = vadd.f32 %v194, %v235
  %237 = vdwg.mxu0
  %238 = vmatpush.msra.mxu0 0.0
  %239 = vmatpush.msra.mxu0 0.0
  %240 = vmatpush.msra.mxu0 0.0
  %241 = vmatpush.msra.mxu0 0.0
  %242 = vmatpush.msra.mxu0 0.0
  %243 = vmatpush.msra.mxu0 0.0
  %244 = vmatpush.msra.mxu0 0.0
  %245 = vmatpush.msra.mxu0 0.0
  %246 = vmatpush.msra.mxu0 0.0
  %247 = vmatpush.msra.mxu0 0.0
  %248 = vmatpush.msra.mxu0 0.0
  %249 = vmatpush.msra.mxu0 0.0
  %250 = vmatpush.msra.mxu0 %v177
  %251 = vmatpush.msra.mxu0 %v173
  %252 = vmatpush.msra.mxu0 %v169
  %253 = vmatpush.msra.mxu0 %v165
  %254 = vmatmul.f32.gmra.mxu0 %v198
  %v255 = vpop.f32.mrf.mxu0
  %v256 = vadd.f32 %v182, %v255
  %257 = vmatmul.f32.gmra.mxu0 %v201
  %v258 = vpop.f32.mrf.mxu0
  %v259 = vadd.f32 %v186, %v258
  %260 = vmatmul.f32.gmra.mxu0 %v204
  %v261 = vpop.f32.mrf.mxu0
  %v262 = vadd.f32 %v190, %v261
  %263 = vmatmul.f32.gmra.mxu0 %v207
  %v264 = vpop.f32.mrf.mxu0
  %v265 = vadd.f32 %v194, %v264
  %266 = vdwg.mxu0
  %267 = vmatpush.msra.mxu0 0.0
  %268 = vmatpush.msra.mxu0 0.0
  %269 = vmatpush.msra.mxu0 0.0
  %270 = vmatpush.msra.mxu0 0.0
  %271 = vmatpush.msra.mxu0 0.0
  %272 = vmatpush.msra.mxu0 0.0
  %273 = vmatpush.msra.mxu0 0.0
  %274 = vmatpush.msra.mxu0 0.0
  %275 = vmatpush.msra.mxu0 0.0
  %276 = vmatpush.msra.mxu0 0.0
  %277 = vmatpush.msra.mxu0 0.0
  %278 = vmatpush.msra.mxu0 0.0
  %279 = vmatpush.msra.mxu0 %v178
  %280 = vmatpush.msra.mxu0 %v174
  %281 = vmatpush.msra.mxu0 %v170
  %282 = vmatpush.msra.mxu0 %v166
  %283 = vmatmul.f32.gmra.mxu0 %v198
  %v284 = vpop.f32.mrf.mxu0
  %v285 = vadd.f32 %v182, %v284
  %286 = vmatmul.f32.gmra.mxu0 %v201
  %v287 = vpop.f32.mrf.mxu0
  %v288 = vadd.f32 %v186, %v287
  %289 = vmatmul.f32.gmra.mxu0 %v204
  %v290 = vpop.f32.mrf.mxu0
  %v291 = vadd.f32 %v190, %v290
  %292 = vmatmul.f32.gmra.mxu0 %v207
  %v293 = vpop.f32.mrf.mxu0
  %v294 = vadd.f32 %v194, %v293
  %295 = vdwg.mxu0
  %296 = vmatpush.msra.mxu0 0.0
  %297 = vmatpush.msra.mxu0 0.0
  %298 = vmatpush.msra.mxu0 0.0
  %299 = vmatpush.msra.mxu0 0.0
  %300 = vmatpush.msra.mxu0 0.0
  %301 = vmatpush.msra.mxu0 0.0
  %302 = vmatpush.msra.mxu0 0.0
  %303 = vmatpush.msra.mxu0 0.0
  %304 = vmatpush.msra.mxu0 0.0
  %305 = vmatpush.msra.mxu0 0.0
  %306 = vmatpush.msra.mxu0 0.0
  %307 = vmatpush.msra.mxu0 0.0
  %308 = vmatpush.msra.mxu0 %v179
  %309 = vmatpush.msra.mxu0 %v175
  %310 = vmatpush.msra.mxu0 %v171
  %311 = vmatpush.msra.mxu0 %v167
  %312 = vmatmul.f32.gmra.mxu0 %v198
  %v313 = vpop.f32.mrf.mxu0
  %v314 = vadd.f32 %v182, %v313
  %315 = vmatmul.f32.gmra.mxu0 %v201
  %v316 = vpop.f32.mrf.mxu0
  %v317 = vadd.f32 %v186, %v316
  %318 = vmatmul.f32.gmra.mxu0 %v204
  %v319 = vpop.f32.mrf.mxu0
  %v320 = vadd.f32 %v190, %v319
  %321 = vmatmul.f32.gmra.mxu0 %v207
  %v322 = vpop.f32.mrf.mxu0
  %v323 = vadd.f32 %v194, %v322
  %324 = vdwg.mxu0
  %v325 = vtanh.pop %v227
  %v326 = vtanh.pop %v256
  %v327 = vtanh.pop %v285
  %v328 = vtanh.pop %v314
  %v329 = vtanh.pop %v230
  %v330 = vtanh.pop %v259
  %v331 = vtanh.pop %v288
  %v332 = vtanh.pop %v317
  %v333 = vtanh.pop %v233
  %v334 = vtanh.pop %v262
  %v335 = vtanh.pop %v291
  %v336 = vtanh.pop %v320
  %v337 = vtanh.pop %v236
  %v338 = vtanh.pop %v265
  %v339 = vtanh.pop %v294
  %v340 = vtanh.pop %v323
  %342 = vset.pattern.permute.xlu0 0
  %343 = vperm.xlu0 %342, %v26
  %v344 = vpop.permute.xlu0 %343
  %v347 = vsel %vm196, %v25, 0
  %349 = vmatpush.msra.mxu0 0.0
  %350 = vmatpush.msra.mxu0 0.0
  %351 = vmatpush.msra.mxu0 0.0
  %352 = vmatpush.msra.mxu0 0.0
  %353 = vmatpush.msra.mxu0 0.0
  %354 = vmatpush.msra.mxu0 0.0
  %355 = vmatpush.msra.mxu0 0.0
  %356 = vmatpush.msra.mxu0 0.0
  %357 = vmatpush.msra.mxu0 0.0
  %358 = vmatpush.msra.mxu0 0.0
  %359 = vmatpush.msra.mxu0 0.0
  %360 = vmatpush.msra.mxu0 0.0
  %361 = vmatpush.msra.mxu0 %v337
  %362 = vmatpush.msra.mxu0 %v333
  %363 = vmatpush.msra.mxu0 %v329
  %364 = vmatpush.msra.mxu0 %v325
  %365 = vmatmul.f32.gmra.mxu0 %v347
  %v366 = vpop.f32.mrf.mxu0
  %v367 = vadd.f32 %v344, %v366
  %368 = vdwg.mxu0
  %369 = vmatpush.msra.mxu0 0.0
  %370 = vmatpush.msra.mxu0 0.0
  %371 = vmatpush.msra.mxu0 0.0
  %372 = vmatpush.msra.mxu0 0.0
  %373 = vmatpush.msra.mxu0 0.0
  %374 = vmatpush.msra.mxu0 0.0
  %375 = vmatpush.msra.mxu0 0.0
  %376 = vmatpush.msra.mxu0 0.0
  %377 = vmatpush.msra.mxu0 0.0
  %378 = vmatpush.msra.mxu0 0.0
  %379 = vmatpush.msra.mxu0 0.0
  %380 = vmatpush.msra.mxu0 0.0
  %381 = vmatpush.msra.mxu0 %v338
  %382 = vmatpush.msra.mxu0 %v334
  %383 = vmatpush.msra.mxu0 %v330
  %384 = vmatpush.msra.mxu0 %v326
  %385 = vmatmul.f32.gmra.mxu0 %v347
  %v386 = vpop.f32.mrf.mxu0
  %v387 = vadd.f32 %v344, %v386
  %388 = vdwg.mxu0
  %389 = vmatpush.msra.mxu0 0.0
  %390 = vmatpush.msra.mxu0 0.0
  %391 = vmatpush.msra.mxu0 0.0
  %392 = vmatpush.msra.mxu0 0.0
  %393 = vmatpush.msra.mxu0 0.0
  %394 = vmatpush.msra.mxu0 0.0
  %395 = vmatpush.msra.mxu0 0.0
  %396 = vmatpush.msra.mxu0 0.0
  %397 = vmatpush.msra.mxu0 0.0
  %398 = vmatpush.msra.mxu0 0.0
  %399 = vmatpush.msra.mxu0 0.0
  %400 = vmatpush.msra.mxu0 0.0
  %401 = vmatpush.msra.mxu0 %v339
  %402 = vmatpush.msra.mxu0 %v335
  %403 = vmatpush.msra.mxu0 %v331
  %404 = vmatpush.msra.mxu0 %v327
  %405 = vmatmul.f32.gmra.mxu0 %v347
  %v406 = vpop.f32.mrf.mxu0
  %v407 = vadd.f32 %v344, %v406
  %408 = vdwg.mxu0
  %409 = vmatpush.msra.mxu0 0.0
  %410 = vmatpush.msra.mxu0 0.0
  %411 = vmatpush.msra.mxu0 0.0
  %412 = vmatpush.msra.mxu0 0.0
  %413 = vmatpush.msra.mxu0 0.0
  %414 = vmatpush.msra.mxu0 0.0
  %415 = vmatpush.msra.mxu0 0.0
  %416 = vmatpush.msra.mxu0 0.0
  %417 = vmatpush.msra.mxu0 0.0
  %418 = vmatpush.msra.mxu0 0.0
  %419 = vmatpush.msra.mxu0 0.0
  %420 = vmatpush.msra.mxu0 0.0
  %421 = vmatpush.msra.mxu0 %v340
  %422 = vmatpush.msra.mxu0 %v336
  %423 = vmatpush.msra.mxu0 %v332
  %424 = vmatpush.msra.mxu0 %v328
  %425 = vmatmul.f32.gmra.mxu0 %v347
  %v426 = vpop.f32.mrf.mxu0
  %v427 = vadd.f32 %v344, %v426
  %428 = vdwg.mxu0
  %v433 = vrot.slane %v387, 7
  %v434 = vrot.slane %v407, 6
  %v435 = vrot.slane %v427, 5
  %vm436 = vcmask 1040384
  %v437 = vsel %vm436, %v367, %v433
  %vm438 = vcmask 1042434
  %v439 = vsel %vm438, %v434, %v435
  %vm440 = vcmask 1041408
  %v441 = vsel %vm440, %v437, %v439
  %v443 = vlaneseq
  %vm444 = vcmp.ge.s32.totalorder %v443, 0
  %vm445 = vcmp.lt.s32.totalorder %v443, 512
  %vm446 = vmand %vm444, %vm445
  %447 = vst.msk [vmem:[%s4] sm:$0xf] %vm446, %v441
  %s448 = scalar_lea.vmem %s0, 8
  %v449 = vld [vmem:[%s448] ss:$2 sm:$0xf]
  %s450 = scalar_lea.vmem %s448, 1
  %v451 = vld [vmem:[%s450] ss:$2 sm:$0xf]
  %v453 = vperm.slane %v449, 0
  %v454 = vperm.slane %v449, 1
  %v455 = vperm.slane %v449, 2
  %v456 = vperm.slane %v449, 3
  %v461 = vmul.f32 %v33, %v453
  %v462 = vmul.f32 %v33, %v454
  %v463 = vmul.f32 %v33, %v455
  %v464 = vmul.f32 %v33, %v456
  %v465 = vmul.f32 %v38, %v453
  %v466 = vmul.f32 %v38, %v454
  %v467 = vmul.f32 %v38, %v455
  %v468 = vmul.f32 %v38, %v456
  %v469 = vmul.f32 %v43, %v453
  %v470 = vmul.f32 %v43, %v454
  %v471 = vmul.f32 %v43, %v455
  %v472 = vmul.f32 %v43, %v456
  %v473 = vmul.f32 %v48, %v453
  %v474 = vmul.f32 %v48, %v454
  %v475 = vmul.f32 %v48, %v455
  %v476 = vmul.f32 %v48, %v456
  %v478 = vperm.slane %v451, 0
  %v479 = vperm.slane %v451, 1
  %v480 = vperm.slane %v451, 2
  %v481 = vperm.slane %v451, 3
  %v486 = vmul.f32 %v77, %v478
  %v487 = vmul.f32 %v77, %v479
  %v488 = vmul.f32 %v77, %v480
  %v489 = vmul.f32 %v77, %v481
  %v490 = vmul.f32 %v81, %v478
  %v491 = vmul.f32 %v81, %v479
  %v492 = vmul.f32 %v81, %v480
  %v493 = vmul.f32 %v81, %v481
  %v494 = vmul.f32 %v85, %v478
  %v495 = vmul.f32 %v85, %v479
  %v496 = vmul.f32 %v85, %v480
  %v497 = vmul.f32 %v85, %v481
  %v498 = vmul.f32 %v89, %v478
  %v499 = vmul.f32 %v89, %v479
  %v500 = vmul.f32 %v89, %v480
  %v501 = vmul.f32 %v89, %v481
  %v502 = vadd.f32 %v461, %v486
  %v503 = vadd.f32 %v462, %v487
  %v504 = vadd.f32 %v463, %v488
  %v505 = vadd.f32 %v464, %v489
  %v506 = vadd.f32 %v465, %v490
  %v507 = vadd.f32 %v466, %v491
  %v508 = vadd.f32 %v467, %v492
  %v509 = vadd.f32 %v468, %v493
  %v510 = vadd.f32 %v469, %v494
  %v511 = vadd.f32 %v470, %v495
  %v512 = vadd.f32 %v471, %v496
  %v513 = vadd.f32 %v472, %v497
  %v514 = vadd.f32 %v473, %v498
  %v515 = vadd.f32 %v474, %v499
  %v516 = vadd.f32 %v475, %v500
  %v517 = vadd.f32 %v476, %v501
  %v518 = vadd.f32 %v502, %v134
  %v519 = vadd.f32 %v503, %v134
  %v520 = vadd.f32 %v504, %v134
  %v521 = vadd.f32 %v505, %v134
  %v522 = vadd.f32 %v506, %v138
  %v523 = vadd.f32 %v507, %v138
  %v524 = vadd.f32 %v508, %v138
  %v525 = vadd.f32 %v509, %v138
  %v526 = vadd.f32 %v510, %v142
  %v527 = vadd.f32 %v511, %v142
  %v528 = vadd.f32 %v512, %v142
  %v529 = vadd.f32 %v513, %v142
  %v530 = vadd.f32 %v514, %v146
  %v531 = vadd.f32 %v515, %v146
  %v532 = vadd.f32 %v516, %v146
  %v533 = vadd.f32 %v517, %v146
  %v534 = vtanh.pop %v518
  %v535 = vtanh.pop %v519
  %v536 = vtanh.pop %v520
  %v537 = vtanh.pop %v521
  %v538 = vtanh.pop %v522
  %v539 = vtanh.pop %v523
  %v540 = vtanh.pop %v524
  %v541 = vtanh.pop %v525
  %v542 = vtanh.pop %v526
  %v543 = vtanh.pop %v527
  %v544 = vtanh.pop %v528
  %v545 = vtanh.pop %v529
  %v546 = vtanh.pop %v530
  %v547 = vtanh.pop %v531
  %v548 = vtanh.pop %v532
  %v549 = vtanh.pop %v533
  %550 = vmatpush.msra.mxu0 0.0
  %551 = vmatpush.msra.mxu0 0.0
  %552 = vmatpush.msra.mxu0 0.0
  %553 = vmatpush.msra.mxu0 0.0
  %554 = vmatpush.msra.mxu0 0.0
  %555 = vmatpush.msra.mxu0 0.0
  %556 = vmatpush.msra.mxu0 0.0
  %557 = vmatpush.msra.mxu0 0.0
  %558 = vmatpush.msra.mxu0 0.0
  %559 = vmatpush.msra.mxu0 0.0
  %560 = vmatpush.msra.mxu0 0.0
  %561 = vmatpush.msra.mxu0 0.0
  %562 = vmatpush.msra.mxu0 %v546
  %563 = vmatpush.msra.mxu0 %v542
  %564 = vmatpush.msra.mxu0 %v538
  %565 = vmatpush.msra.mxu0 %v534
  %566 = vmatmul.f32.gmra.mxu0 %v198
  %v567 = vpop.f32.mrf.mxu0
  %v568 = vadd.f32 %v182, %v567
  %569 = vmatmul.f32.gmra.mxu0 %v201
  %v570 = vpop.f32.mrf.mxu0
  %v571 = vadd.f32 %v186, %v570
  %572 = vmatmul.f32.gmra.mxu0 %v204
  %v573 = vpop.f32.mrf.mxu0
  %v574 = vadd.f32 %v190, %v573
  %575 = vmatmul.f32.gmra.mxu0 %v207
  %v576 = vpop.f32.mrf.mxu0
  %v577 = vadd.f32 %v194, %v576
  %578 = vdwg.mxu0
  %579 = vmatpush.msra.mxu0 0.0
  %580 = vmatpush.msra.mxu0 0.0
  %581 = vmatpush.msra.mxu0 0.0
  %582 = vmatpush.msra.mxu0 0.0
  %583 = vmatpush.msra.mxu0 0.0
  %584 = vmatpush.msra.mxu0 0.0
  %585 = vmatpush.msra.mxu0 0.0
  %586 = vmatpush.msra.mxu0 0.0
  %587 = vmatpush.msra.mxu0 0.0
  %588 = vmatpush.msra.mxu0 0.0
  %589 = vmatpush.msra.mxu0 0.0
  %590 = vmatpush.msra.mxu0 0.0
  %591 = vmatpush.msra.mxu0 %v547
  %592 = vmatpush.msra.mxu0 %v543
  %593 = vmatpush.msra.mxu0 %v539
  %594 = vmatpush.msra.mxu0 %v535
  %595 = vmatmul.f32.gmra.mxu0 %v198
  %v596 = vpop.f32.mrf.mxu0
  %v597 = vadd.f32 %v182, %v596
  %598 = vmatmul.f32.gmra.mxu0 %v201
  %v599 = vpop.f32.mrf.mxu0
  %v600 = vadd.f32 %v186, %v599
  %601 = vmatmul.f32.gmra.mxu0 %v204
  %v602 = vpop.f32.mrf.mxu0
  %v603 = vadd.f32 %v190, %v602
  %604 = vmatmul.f32.gmra.mxu0 %v207
  %v605 = vpop.f32.mrf.mxu0
  %v606 = vadd.f32 %v194, %v605
  %607 = vdwg.mxu0
  %608 = vmatpush.msra.mxu0 0.0
  %609 = vmatpush.msra.mxu0 0.0
  %610 = vmatpush.msra.mxu0 0.0
  %611 = vmatpush.msra.mxu0 0.0
  %612 = vmatpush.msra.mxu0 0.0
  %613 = vmatpush.msra.mxu0 0.0
  %614 = vmatpush.msra.mxu0 0.0
  %615 = vmatpush.msra.mxu0 0.0
  %616 = vmatpush.msra.mxu0 0.0
  %617 = vmatpush.msra.mxu0 0.0
  %618 = vmatpush.msra.mxu0 0.0
  %619 = vmatpush.msra.mxu0 0.0
  %620 = vmatpush.msra.mxu0 %v548
  %621 = vmatpush.msra.mxu0 %v544
  %622 = vmatpush.msra.mxu0 %v540
  %623 = vmatpush.msra.mxu0 %v536
  %624 = vmatmul.f32.gmra.mxu0 %v198
  %v625 = vpop.f32.mrf.mxu0
  %v626 = vadd.f32 %v182, %v625
  %627 = vmatmul.f32.gmra.mxu0 %v201
  %v628 = vpop.f32.mrf.mxu0
  %v629 = vadd.f32 %v186, %v628
  %630 = vmatmul.f32.gmra.mxu0 %v204
  %v631 = vpop.f32.mrf.mxu0
  %v632 = vadd.f32 %v190, %v631
  %633 = vmatmul.f32.gmra.mxu0 %v207
  %v634 = vpop.f32.mrf.mxu0
  %v635 = vadd.f32 %v194, %v634
  %636 = vdwg.mxu0
  %637 = vmatpush.msra.mxu0 0.0
  %638 = vmatpush.msra.mxu0 0.0
  %639 = vmatpush.msra.mxu0 0.0
  %640 = vmatpush.msra.mxu0 0.0
  %641 = vmatpush.msra.mxu0 0.0
  %642 = vmatpush.msra.mxu0 0.0
  %643 = vmatpush.msra.mxu0 0.0
  %644 = vmatpush.msra.mxu0 0.0
  %645 = vmatpush.msra.mxu0 0.0
  %646 = vmatpush.msra.mxu0 0.0
  %647 = vmatpush.msra.mxu0 0.0
  %648 = vmatpush.msra.mxu0 0.0
  %649 = vmatpush.msra.mxu0 %v549
  %650 = vmatpush.msra.mxu0 %v545
  %651 = vmatpush.msra.mxu0 %v541
  %652 = vmatpush.msra.mxu0 %v537
  %653 = vmatmul.f32.gmra.mxu0 %v198
  %v654 = vpop.f32.mrf.mxu0
  %v655 = vadd.f32 %v182, %v654
  %656 = vmatmul.f32.gmra.mxu0 %v201
  %v657 = vpop.f32.mrf.mxu0
  %v658 = vadd.f32 %v186, %v657
  %659 = vmatmul.f32.gmra.mxu0 %v204
  %v660 = vpop.f32.mrf.mxu0
  %v661 = vadd.f32 %v190, %v660
  %662 = vmatmul.f32.gmra.mxu0 %v207
  %v663 = vpop.f32.mrf.mxu0
  %v664 = vadd.f32 %v194, %v663
  %665 = vdwg.mxu0
  %v666 = vtanh.pop %v568
  %v667 = vtanh.pop %v597
  %v668 = vtanh.pop %v626
  %v669 = vtanh.pop %v655
  %v670 = vtanh.pop %v571
  %v671 = vtanh.pop %v600
  %v672 = vtanh.pop %v629
  %v673 = vtanh.pop %v658
  %v674 = vtanh.pop %v574
  %v675 = vtanh.pop %v603
  %v676 = vtanh.pop %v632
  %v677 = vtanh.pop %v661
  %v678 = vtanh.pop %v577
  %v679 = vtanh.pop %v606
  %v680 = vtanh.pop %v635
  %v681 = vtanh.pop %v664
  %682 = vmatpush.msra.mxu0 0.0
  %683 = vmatpush.msra.mxu0 0.0
  %684 = vmatpush.msra.mxu0 0.0
  %685 = vmatpush.msra.mxu0 0.0
  %686 = vmatpush.msra.mxu0 0.0
  %687 = vmatpush.msra.mxu0 0.0
  %688 = vmatpush.msra.mxu0 0.0
  %689 = vmatpush.msra.mxu0 0.0
  %690 = vmatpush.msra.mxu0 0.0
  %691 = vmatpush.msra.mxu0 0.0
  %692 = vmatpush.msra.mxu0 0.0
  %693 = vmatpush.msra.mxu0 0.0
  %694 = vmatpush.msra.mxu0 %v678
  %695 = vmatpush.msra.mxu0 %v674
  %696 = vmatpush.msra.mxu0 %v670
  %697 = vmatpush.msra.mxu0 %v666
  %698 = vmatmul.f32.gmra.mxu0 %v347
  %v699 = vpop.f32.mrf.mxu0
  %v700 = vadd.f32 %v344, %v699
  %701 = vdwg.mxu0
  %702 = vmatpush.msra.mxu0 0.0
  %703 = vmatpush.msra.mxu0 0.0
  %704 = vmatpush.msra.mxu0 0.0
  %705 = vmatpush.msra.mxu0 0.0
  %706 = vmatpush.msra.mxu0 0.0
  %707 = vmatpush.msra.mxu0 0.0
  %708 = vmatpush.msra.mxu0 0.0
  %709 = vmatpush.msra.mxu0 0.0
  %710 = vmatpush.msra.mxu0 0.0
  %711 = vmatpush.msra.mxu0 0.0
  %712 = vmatpush.msra.mxu0 0.0
  %713 = vmatpush.msra.mxu0 0.0
  %714 = vmatpush.msra.mxu0 %v679
  %715 = vmatpush.msra.mxu0 %v675
  %716 = vmatpush.msra.mxu0 %v671
  %717 = vmatpush.msra.mxu0 %v667
  %718 = vmatmul.f32.gmra.mxu0 %v347
  %v719 = vpop.f32.mrf.mxu0
  %v720 = vadd.f32 %v344, %v719
  %721 = vdwg.mxu0
  %722 = vmatpush.msra.mxu0 0.0
  %723 = vmatpush.msra.mxu0 0.0
  %724 = vmatpush.msra.mxu0 0.0
  %725 = vmatpush.msra.mxu0 0.0
  %726 = vmatpush.msra.mxu0 0.0
  %727 = vmatpush.msra.mxu0 0.0
  %728 = vmatpush.msra.mxu0 0.0
  %729 = vmatpush.msra.mxu0 0.0
  %730 = vmatpush.msra.mxu0 0.0
  %731 = vmatpush.msra.mxu0 0.0
  %732 = vmatpush.msra.mxu0 0.0
  %733 = vmatpush.msra.mxu0 0.0
  %734 = vmatpush.msra.mxu0 %v680
  %735 = vmatpush.msra.mxu0 %v676
  %736 = vmatpush.msra.mxu0 %v672
  %737 = vmatpush.msra.mxu0 %v668
  %738 = vmatmul.f32.gmra.mxu0 %v347
  %v739 = vpop.f32.mrf.mxu0
  %v740 = vadd.f32 %v344, %v739
  %741 = vdwg.mxu0
  %742 = vmatpush.msra.mxu0 0.0
  %743 = vmatpush.msra.mxu0 0.0
  %744 = vmatpush.msra.mxu0 0.0
  %745 = vmatpush.msra.mxu0 0.0
  %746 = vmatpush.msra.mxu0 0.0
  %747 = vmatpush.msra.mxu0 0.0
  %748 = vmatpush.msra.mxu0 0.0
  %749 = vmatpush.msra.mxu0 0.0
  %750 = vmatpush.msra.mxu0 0.0
  %751 = vmatpush.msra.mxu0 0.0
  %752 = vmatpush.msra.mxu0 0.0
  %753 = vmatpush.msra.mxu0 0.0
  %754 = vmatpush.msra.mxu0 %v681
  %755 = vmatpush.msra.mxu0 %v677
  %756 = vmatpush.msra.mxu0 %v673
  %757 = vmatpush.msra.mxu0 %v669
  %758 = vmatmul.f32.gmra.mxu0 %v347
  %v759 = vpop.f32.mrf.mxu0
  %v760 = vadd.f32 %v344, %v759
  %761 = vdwg.mxu0
  %v766 = vrot.slane %v720, 7
  %v767 = vrot.slane %v740, 6
  %v768 = vrot.slane %v760, 5
  %v769 = vsel %vm436, %v700, %v766
  %v770 = vsel %vm438, %v767, %v768
  %v771 = vsel %vm440, %v769, %v770
  %s773 = scalar_lea.vmem %s4, 4
  %774 = vst.msk [vmem:[%s773] sm:$0xf] %vm446, %v771
  // Predicated region
  $region18: #{_pinn_forward_impl.1} parent=0 // pred_check
    _
  $region19: #{_pinn_forward_impl.1} parent=0 // pred_check_branch
    %776 = sbr.rel (0) target = $region21
  $region20: #{_pinn_forward_impl.1} parent=0 // pred_region
    _
  $region21: #{_pinn_forward_impl.1} parent=0 // pred_fallthru
    _
  // Predicated region
  $region22: #{_pinn_forward_impl.1} parent=0 // pred_check
    _
  $region23: #{_pinn_forward_impl.1} parent=0 // pred_check_branch
    %778 = sbr.rel (0) target = $region25
  $region24: #{_pinn_forward_impl.1} parent=0 // pred_region
    _
  $region25: #{_pinn_forward_impl.1} parent=0 // pred_fallthru
    _

</llo_original>
